<compile_context>
chip_gen: v7x
topology: tpu7x:2x2x1
jax: 0.10.0
libtpu: 0.0.40
codegen_flags: <defaults>
</compile_context>

<pallas_src>
import jax
import jax.numpy as jnp
from jax.experimental import pallas as pl
from jax.experimental.pallas import tpu as pltpu

# ----------------------------------------------------------------------------
# Config (small, consistent with the module's forward)
# ----------------------------------------------------------------------------
BATCH = 16
X_DIM = 32
INFO_DIM = 4                 # len(METADATA_KEYS) placeholder
ENCODER_H_DIM = 32
DECODER_H_DIM = 32
N_DECODER_BLOCK = 2
N_HEADS = N_DECODER_BLOCK + 1
Y_DIM = 16
RES_DIM = 24                 # targets_decomposer_components.shape[1]
HEAD_SEG = Y_DIM + RES_DIM   # 40 lanes per head: [y | y_res]
OUT_PAD = 128                # packed lane-dense output width (3*40 + 8 pad)

GENDER_ROWS, DAY_ROWS, DONOR_ROWS = 2, 7, 3
EMB_ROWS = GENDER_ROWS + DAY_ROWS + DONOR_ROWS   # 12 stacked embedding rows
IN_DIM = X_DIM + INFO_DIM + EMB_ROWS             # 48 = [x | info | one-hot]

# Row layout inside the packed (148, 32) "narrow" weight slab (bf16).
_W_IN_R0, _W_IN_R1 = 0, IN_DIM                       # (48, 32) w_in ⊕ emb table
_W_ENC_R0, _W_ENC_R1 = 48, 80                        # (32, 32) encoder
_W_DEC_R0 = (80, 112)                                # 2 x (32, 32) decoder blocks
_BIAS_R0, _BIAS_R1 = 144, 148                        # 4 bias rows (in/enc/dec0/dec1)
W32_ROWS = 148

# Row layout inside the packed (99, 128) "head" slab (bf16).
_W_HEAD_R0, _W_HEAD_R1 = 0, N_HEADS * DECODER_H_DIM  # (96, 128) block-diag heads
_AFF_R0, _AFF_R1 = 96, 99                            # [head bias | scale | loc]
W128_ROWS = 99


# ----------------------------------------------------------------------------
# Fused forward kernel (one program per batch tile; default: whole batch)
# ----------------------------------------------------------------------------
def _fused_forward_kernel(xin_ref, w32_ref, w128_ref, out_ref):
    # biases / affine rows upcast once to f32
    b = w32_ref[_BIAS_R0:_BIAS_R1, :].astype(jnp.float32)        # (4, 32)
    aff = w128_ref[_AFF_R0:_AFF_R1, :].astype(jnp.float32)       # (3, 128)

    # --- encoder_in_fc(x ⊕ info) + embedding sum, fused into one matmul -----
    h = (jnp.dot(xin_ref[...], w32_ref[_W_IN_R0:_W_IN_R1, :],
                 preferred_element_type=jnp.float32)
         + b[0:1, :])

    # --- synthetic encoder: z = relu(h @ We + be) ----------------------------
    z = jnp.maximum(
        jnp.dot(h.astype(jnp.bfloat16), w32_ref[_W_ENC_R0:_W_ENC_R1, :],
                preferred_element_type=jnp.float32) + b[1:2, :], 0.0)

    # --- synthetic decoder: residual relu blocks (unrolled, vreg-resident) ---
    hs = [z]
    for i in range(N_DECODER_BLOCK):
        hp = hs[-1]
        hnew = jnp.maximum(
            jnp.dot(hp.astype(jnp.bfloat16),
                    w32_ref[_W_DEC_R0[i]:_W_DEC_R0[i] + DECODER_H_DIM, :],
                    preferred_element_type=jnp.float32)
            + b[2 + i:3 + i, :], 0.0) + hp
        hs.append(hnew)

    # --- all heads in one block-diagonal (96,128) MXU push -------------------
    # packed output lanes: [y0 (16) | res0 (24) | y1 | res1 | y2 | res2 | pad8]
    hs_cat = jnp.concatenate(hs, axis=1).astype(jnp.bfloat16)    # (tb, 96)
    base = jnp.dot(hs_cat, w128_ref[_W_HEAD_R0:_W_HEAD_R1, :],
                   preferred_element_type=jnp.float32) + aff[0:1, :]
    # scale row is 1.0 / loc row is 0.0 outside the y columns, so one affine
    # handles y = base*scale+loc and leaves y_res (and pad) untouched.
    out_ref[...] = base * aff[1:2, :] + aff[2:3, :]


def _fused_forward_call(xin, pk, tile_b):
    b_total = xin.shape[0]
    assert b_total % tile_b == 0, "batch must be divisible by tile_b"
    grid = (b_total // tile_b,)

    return pl.pallas_call(
        _fused_forward_kernel,
        out_shape=jax.ShapeDtypeStruct((b_total, OUT_PAD), jnp.float32),
        grid_spec=pltpu.PrefetchScalarGridSpec(
            num_scalar_prefetch=0,
            grid=grid,
            in_specs=[
                pl.BlockSpec((tile_b, IN_DIM), lambda i: (i, 0)),        # x⊕info⊕1hot
                pl.BlockSpec((W32_ROWS, ENCODER_H_DIM), lambda i: (0, 0)),   # (148,32)
                pl.BlockSpec((W128_ROWS, OUT_PAD), lambda i: (0, 0)),         # (99,128)
            ],
            out_specs=pl.BlockSpec((tile_b, OUT_PAD), lambda i: (i, 0)),
        ),
        compiler_params=pltpu.CompilerParams(
            dimension_semantics=("parallel",)),
    )(xin, pk["w32"], pk["w128"])


# ----------------------------------------------------------------------------
# Parameter construction (deterministic, in-script) + packing for the kernel
# ----------------------------------------------------------------------------
def init_raw_params(key):
    keys = jax.random.split(key, 16)
    u = lambda k, shape, s=0.1: (jax.random.uniform(k, shape, jnp.float32) - 0.5) * 2 * s

    p = {}
    p["y_loc"] = u(keys[0], (1, Y_DIM), 1.0)
    p["y_scale"] = jax.random.uniform(keys[1], (1, Y_DIM), jnp.float32) + 0.5
    p["gender_embedding"] = jax.random.uniform(keys[2], (GENDER_ROWS, ENCODER_H_DIM), jnp.float32)
    p["donor_embedding"] = jax.random.uniform(keys[3], (DONOR_ROWS, ENCODER_H_DIM), jnp.float32)
    p["day_embedding"] = jax.random.uniform(keys[4], (DAY_ROWS, ENCODER_H_DIM), jnp.float32)

    # encoder_in_fc : Linear(x_dim + info_dim, encoder_h_dim), stored (in, out)
    p["enc_in_w_t"] = u(keys[5], (X_DIM + INFO_DIM, ENCODER_H_DIM))
    p["enc_in_b"] = u(keys[6], (1, ENCODER_H_DIM))

    # synthetic encoder : Linear(encoder_h_dim, decoder_h_dim) + relu
    p["enc_w_t"] = u(keys[7], (ENCODER_H_DIM, DECODER_H_DIM))
    p["enc_b"] = u(keys[8], (1, DECODER_H_DIM))

    # synthetic decoder : n_decoder_block residual relu blocks
    dec_keys = jax.random.split(keys[9], 2 * N_DECODER_BLOCK)
    p["dec_w_t"] = [u(dec_keys[2 * i], (DECODER_H_DIM, DECODER_H_DIM))
                    for i in range(N_DECODER_BLOCK)]
    p["dec_b"] = [u(dec_keys[2 * i + 1], (1, DECODER_H_DIM))
                  for i in range(N_DECODER_BLOCK)]

    # decoder_out_fcs / decoder_out_res_fcs : n_decoder_block + 1 heads each
    head_keys = jax.random.split(keys[10], 4 * N_HEADS)
    p["out_w_t"], p["out_b"], p["res_w_t"], p["res_b"] = [], [], [], []
    for i in range(N_HEADS):
        p["out_w_t"].append(u(head_keys[4 * i + 0], (DECODER_H_DIM, Y_DIM)))
        p["out_b"].append(u(head_keys[4 * i + 1], (1, Y_DIM)))
        p["res_w_t"].append(u(head_keys[4 * i + 2], (DECODER_H_DIM, RES_DIM)))
        p["res_b"].append(u(head_keys[4 * i + 3], (1, RES_DIM)))
    return p


def pack_params(raw):
    """Pack raw parameters into the two bf16 slabs the kernel consumes."""
    # ---- (148, 32) narrow slab: [w_in⊕emb | w_enc | w_dec0 | w_dec1 | biases]
    emb = jnp.concatenate([raw["gender_embedding"],          # rows 0:2  (global ids 0..1)
                           raw["day_embedding"],             # rows 2:9  (global ids 2..8)
                           raw["donor_embedding"]], axis=0)  # rows 9:12 (global ids 9..11)
    w_in_full = jnp.concatenate([raw["enc_in_w_t"], emb], axis=0)          # (48, 32)
    bias = jnp.concatenate([raw["enc_in_b"], raw["enc_b"]] + raw["dec_b"],
                           axis=0)                                          # (4, 32)
    w32 = jnp.concatenate([w_in_full, raw["enc_w_t"]] + raw["dec_w_t"]
                          + [bias], axis=0)                                 # (148, 32)

    # ---- (99, 128) head slab: block-diagonal head weights + affine rows -----
    w_bd = jnp.zeros((N_HEADS * DECODER_H_DIM, OUT_PAD), jnp.float32)       # (96, 128)
    bias_row = jnp.zeros((1, OUT_PAD), jnp.float32)
    scale_row = jnp.ones((1, OUT_PAD), jnp.float32)
    loc_row = jnp.zeros((1, OUT_PAD), jnp.float32)
    for i in range(N_HEADS):
        r0 = i * DECODER_H_DIM
        c0 = i * HEAD_SEG
        w_bd = w_bd.at[r0:r0 + DECODER_H_DIM, c0:c0 + Y_DIM].set(raw["out_w_t"][i])
        w_bd = w_bd.at[r0:r0 + DECODER_H_DIM,
                       c0 + Y_DIM:c0 + HEAD_SEG].set(raw["res_w_t"][i])
        bias_row = bias_row.at[:, c0:c0 + Y_DIM].set(raw["out_b"][i])
        bias_row = bias_row.at[:, c0 + Y_DIM:c0 + HEAD_SEG].set(raw["res_b"][i])
        scale_row = scale_row.at[:, c0:c0 + Y_DIM].set(raw["y_scale"])
        loc_row = loc_row.at[:, c0:c0 + Y_DIM].set(raw["y_loc"])
    w128 = jnp.concatenate([w_bd, bias_row, scale_row, loc_row], axis=0)    # (99, 128)

    return {"w32": w32.astype(jnp.bfloat16),
            "w128": w128.astype(jnp.bfloat16)}


# ----------------------------------------------------------------------------
# Forward pass (glue in JAX, all math in the single fused Pallas kernel)
# ----------------------------------------------------------------------------
def multi_encoder_decoder_forward(packed, x, gender_id, info, day_id, donor_id,
                                  *, tile_b=None):
    b_total = x.shape[0]
    # Globalized row indices into the stacked (12,32) embedding table; the
    # one-hot is built here so the embedding lookup fuses into the single
    # (B,48)x(48,32) input matmul. Out-of-range ids one-hot to all-zeros
    # (missing embedding) rather than raising as torch indexing would.
    onehot = (jax.nn.one_hot(gender_id, EMB_ROWS, dtype=jnp.float32)
              + jax.nn.one_hot((day_id - 1) + GENDER_ROWS, EMB_ROWS,
                               dtype=jnp.float32)
              + jax.nn.one_hot((donor_id - 1) + GENDER_ROWS + DAY_ROWS, EMB_ROWS,
                               dtype=jnp.float32))
    xin = jnp.concatenate(
        [x, info.reshape(b_total, INFO_DIM), onehot], axis=1).astype(jnp.bfloat16)

    tb = b_total if tile_b is None else tile_b
    slab = _fused_forward_call(xin, packed, tb)                   # (B, 128) f32

    ys = [slab[:, i * HEAD_SEG: i * HEAD_SEG + Y_DIM] for i in range(N_HEADS)]
    y_reses = [slab[:, i * HEAD_SEG + Y_DIM: (i + 1) * HEAD_SEG]
               for i in range(N_HEADS)]
    return ys, y_reses


# ----------------------------------------------------------------------------
# Pure-JAX reference (for correctness check; f32, HIGHEST precision)
# ----------------------------------------------------------------------------
def reference_forward(raw, x, gender_id, info, day_id, donor_id):
    hi = jax.lax.Precision.HIGHEST
    b_total = x.shape[0]
    h = jnp.concatenate([x, info.reshape(b_total, INFO_DIM)], axis=1)
    h = jnp.dot(h, raw["enc_in_w_t"], precision=hi) + raw["enc_in_b"]
    h = (h + raw["gender_embedding"][gender_id]
         + raw["day_embedding"][day_id - 1]
         + raw["donor_embedding"][donor_id - 1])
    z = jnp.maximum(jnp.dot(h, raw["enc_w_t"], precision=hi) + raw["enc_b"], 0.0)
    hs = [z]
    for i in range(N_DECODER_BLOCK):
        hs.append(jnp.maximum(jnp.dot(hs[-1], raw["dec_w_t"][i], precision=hi)
                              + raw["dec_b"][i], 0.0) + hs[-1])
    ys, y_reses = [], []
    for i in range(N_HEADS):
        yb = jnp.dot(hs[i], raw["out_w_t"][i], precision=hi) + raw["out_b"][i]
        ys.append(yb * raw["y_scale"] + raw["y_loc"])
        y_reses.append(jnp.dot(hs[i], raw["res_w_t"][i], precision=hi)
                       + raw["res_b"][i])
    return ys, y_reses


# ----------------------------------------------------------------------------
if __name__ == "__main__":
    key = jax.random.PRNGKey(0)
    k_param, k_x, k_info, k_g, k_d, k_dn = jax.random.split(key, 6)

    raw = init_raw_params(k_param)
    packed = pack_params(raw)

    x = jax.random.normal(k_x, (BATCH, X_DIM), jnp.float32)
    info = jax.random.normal(k_info, (BATCH, INFO_DIM), jnp.float32)
    gender_id = jax.random.randint(k_g, (BATCH,), 0, 2)
    day_id = jax.random.randint(k_d, (BATCH,), 1, 8)      # 1..7
    donor_id = jax.random.randint(k_dn, (BATCH,), 1, 4)   # 1..3

    fwd = jax.jit(multi_encoder_decoder_forward)          # tile_b=None -> grid=(1,)
    y_preds, y_res_preds = fwd(packed, x, gender_id, info, day_id, donor_id)
    jax.block_until_ready(y_preds)
    jax.block_until_ready(y_res_preds)

    assert len(y_preds) == N_HEADS and len(y_res_preds) == N_HEADS
    assert y_preds[0].shape == (BATCH, Y_DIM)
    assert y_res_preds[0].shape == (BATCH, RES_DIM)

    # correctness vs. pure-JAX f32 reference (kernel uses bf16 MXU inputs)
    ys_ref, yres_ref = reference_forward(raw, x, gender_id, info, day_id, donor_id)
    for i in range(N_HEADS):
        assert jnp.allclose(y_preds[i], ys_ref[i], atol=5e-2, rtol=5e-2), \
            f"y mismatch head {i}"
        assert jnp.allclose(y_res_preds[i], yres_ref[i], atol=5e-2, rtol=5e-2), \
            f"y_res mismatch head {i}"

    print("KERNEL_OK")
</pallas_src>

<mosaic_0001>
module attributes {stable_mosaic.version = 11 : i64} {
  func.func @_fused_forward_kernel(%arg0: i32, %arg1: memref<16x48xbf16, #tpu.memory_space<vmem>>, %arg2: memref<148x32xbf16, #tpu.memory_space<vmem>>, %arg3: memref<99x128xbf16, #tpu.memory_space<vmem>>, %arg4: memref<16x128xf32, #tpu.memory_space<vmem>>) attributes {dimension_semantics = [#tpu.dimension_semantics<parallel>], iteration_bounds = array<i64: 1>, scalar_prefetch = 0 : i64, scratch_operands = 0 : i64, tpu.core_type = #tpu.core_type<tc>, window_params = [{transform_indices = @transform_0, window_bounds = array<i64: 16, 48>}, {pipeline_mode = #tpu.pipeline_mode<synchronous>, transform_indices = @transform_1, window_bounds = array<i64: 148, 32>}, {pipeline_mode = #tpu.pipeline_mode<synchronous>, transform_indices = @transform_2, window_bounds = array<i64: 99, 128>}, {transform_indices = @transform_3, window_bounds = array<i64: 16, 128>}]} {
    %c144 = arith.constant 144 : index
    %c0 = arith.constant 0 : index
    %0 = vector.load %arg2[%c144, %c0] : memref<148x32xbf16, #tpu.memory_space<vmem>>, vector<4x32xbf16>
    %1 = arith.extf %0 : vector<4x32xbf16> to vector<4x32xf32>
    %c96 = arith.constant 96 : index
    %c0_0 = arith.constant 0 : index
    %2 = vector.load %arg3[%c96, %c0_0] : memref<99x128xbf16, #tpu.memory_space<vmem>>, vector<3x128xbf16>
    %3 = arith.extf %2 : vector<3x128xbf16> to vector<3x128xf32>
    %c0_1 = arith.constant 0 : index
    %c0_2 = arith.constant 0 : index
    %4 = vector.load %arg1[%c0_1, %c0_2] : memref<16x48xbf16, #tpu.memory_space<vmem>>, vector<16x48xbf16>
    %c0_3 = arith.constant 0 : index
    %c0_4 = arith.constant 0 : index
    %5 = vector.load %arg2[%c0_3, %c0_4] : memref<148x32xbf16, #tpu.memory_space<vmem>>, vector<48x32xbf16>
    %cst = arith.constant dense<0.000000e+00> : vector<16x32xf32>
    %6 = tpu.matmul %4, %5, %cst {dimension_numbers = #tpu.dot_dimension_numbers<[1], [0], [0], [1], [0, 0, 1, 1], [], []>} : vector<16x48xbf16>, vector<48x32xbf16>, vector<16x32xf32> -> vector<16x32xf32>
    %7 = vector.extract_strided_slice %1 {offsets = [0, 0], sizes = [1, 32], strides = [1, 1]} : vector<4x32xf32> to vector<1x32xf32>
    %8 = vector.broadcast %7 : vector<1x32xf32> to vector<16x32xf32>
    %9 = arith.addf %6, %8 : vector<16x32xf32>
    %10 = arith.truncf %9 : vector<16x32xf32> to vector<16x32xbf16>
    %c48 = arith.constant 48 : index
    %c0_5 = arith.constant 0 : index
    %11 = vector.load %arg2[%c48, %c0_5] : memref<148x32xbf16, #tpu.memory_space<vmem>>, vector<32x32xbf16>
    %cst_6 = arith.constant dense<0.000000e+00> : vector<16x32xf32>
    %12 = tpu.matmul %10, %11, %cst_6 {dimension_numbers = #tpu.dot_dimension_numbers<[1], [0], [0], [1], [0, 0, 1, 1], [], []>} : vector<16x32xbf16>, vector<32x32xbf16>, vector<16x32xf32> -> vector<16x32xf32>
    %13 = vector.extract_strided_slice %1 {offsets = [1, 0], sizes = [1, 32], strides = [1, 1]} : vector<4x32xf32> to vector<1x32xf32>
    %14 = vector.broadcast %13 : vector<1x32xf32> to vector<16x32xf32>
    %15 = arith.addf %12, %14 : vector<16x32xf32>
    %cst_7 = arith.constant 0.000000e+00 : f32
    %16 = vector.broadcast %cst_7 : f32 to vector<16x32xf32>
    %17 = arith.maximumf %15, %16 : vector<16x32xf32>
    %18 = arith.truncf %17 : vector<16x32xf32> to vector<16x32xbf16>
    %c80 = arith.constant 80 : index
    %c0_8 = arith.constant 0 : index
    %19 = vector.load %arg2[%c80, %c0_8] : memref<148x32xbf16, #tpu.memory_space<vmem>>, vector<32x32xbf16>
    %cst_9 = arith.constant dense<0.000000e+00> : vector<16x32xf32>
    %20 = tpu.matmul %18, %19, %cst_9 {dimension_numbers = #tpu.dot_dimension_numbers<[1], [0], [0], [1], [0, 0, 1, 1], [], []>} : vector<16x32xbf16>, vector<32x32xbf16>, vector<16x32xf32> -> vector<16x32xf32>
    %21 = vector.extract_strided_slice %1 {offsets = [2, 0], sizes = [1, 32], strides = [1, 1]} : vector<4x32xf32> to vector<1x32xf32>
    %22 = vector.broadcast %21 : vector<1x32xf32> to vector<16x32xf32>
    %23 = arith.addf %20, %22 : vector<16x32xf32>
    %cst_10 = arith.constant 0.000000e+00 : f32
    %24 = vector.broadcast %cst_10 : f32 to vector<16x32xf32>
    %25 = arith.maximumf %23, %24 : vector<16x32xf32>
    %26 = arith.addf %25, %17 : vector<16x32xf32>
    %27 = arith.truncf %26 : vector<16x32xf32> to vector<16x32xbf16>
    %c112 = arith.constant 112 : index
    %c0_11 = arith.constant 0 : index
    %28 = vector.load %arg2[%c112, %c0_11] : memref<148x32xbf16, #tpu.memory_space<vmem>>, vector<32x32xbf16>
    %cst_12 = arith.constant dense<0.000000e+00> : vector<16x32xf32>
    %29 = tpu.matmul %27, %28, %cst_12 {dimension_numbers = #tpu.dot_dimension_numbers<[1], [0], [0], [1], [0, 0, 1, 1], [], []>} : vector<16x32xbf16>, vector<32x32xbf16>, vector<16x32xf32> -> vector<16x32xf32>
    %30 = vector.extract_strided_slice %1 {offsets = [3, 0], sizes = [1, 32], strides = [1, 1]} : vector<4x32xf32> to vector<1x32xf32>
    %31 = vector.broadcast %30 : vector<1x32xf32> to vector<16x32xf32>
    %32 = arith.addf %29, %31 : vector<16x32xf32>
    %cst_13 = arith.constant 0.000000e+00 : f32
    %33 = vector.broadcast %cst_13 : f32 to vector<16x32xf32>
    %34 = arith.maximumf %32, %33 : vector<16x32xf32>
    %35 = arith.addf %34, %26 : vector<16x32xf32>
    %36 = tpu.concatenate %17, %26, %35 in 1 : vector<16x32xf32>, vector<16x32xf32>, vector<16x32xf32> -> vector<16x96xf32>
    %37 = arith.truncf %36 : vector<16x96xf32> to vector<16x96xbf16>
    %c0_14 = arith.constant 0 : index
    %c0_15 = arith.constant 0 : index
    %38 = vector.load %arg3[%c0_14, %c0_15] : memref<99x128xbf16, #tpu.memory_space<vmem>>, vector<96x128xbf16>
    %cst_16 = arith.constant dense<0.000000e+00> : vector<16x128xf32>
    %39 = tpu.matmul %37, %38, %cst_16 {dimension_numbers = #tpu.dot_dimension_numbers<[1], [0], [0], [1], [0, 0, 1, 1], [], []>} : vector<16x96xbf16>, vector<96x128xbf16>, vector<16x128xf32> -> vector<16x128xf32>
    %40 = vector.extract_strided_slice %3 {offsets = [0, 0], sizes = [1, 128], strides = [1, 1]} : vector<3x128xf32> to vector<1x128xf32>
    %41 = vector.broadcast %40 : vector<1x128xf32> to vector<16x128xf32>
    %42 = arith.addf %39, %41 : vector<16x128xf32>
    %43 = vector.extract_strided_slice %3 {offsets = [1, 0], sizes = [1, 128], strides = [1, 1]} : vector<3x128xf32> to vector<1x128xf32>
    %44 = vector.broadcast %43 : vector<1x128xf32> to vector<16x128xf32>
    %45 = arith.mulf %42, %44 : vector<16x128xf32>
    %46 = vector.extract_strided_slice %3 {offsets = [2, 0], sizes = [1, 128], strides = [1, 1]} : vector<3x128xf32> to vector<1x128xf32>
    %47 = vector.broadcast %46 : vector<1x128xf32> to vector<16x128xf32>
    %48 = arith.addf %45, %47 : vector<16x128xf32>
    %c0_17 = arith.constant 0 : index
    %c0_18 = arith.constant 0 : index
    %49 = vector.load %arg4[%c0_17, %c0_18] : memref<16x128xf32, #tpu.memory_space<vmem>>, vector<16x128xf32>
    tpu.vector_store %arg4[%c0_17, %c0_18], %48 {strides = array<i32>} : memref<16x128xf32, #tpu.memory_space<vmem>>, vector<16x128xf32>,
    return
  }
  func.func @transform_0(%arg0: i32) -> (i32, i32) {
    %c0_i32 = arith.constant 0 : i32
    %c0_i32_0 = arith.constant 0 : i32
    return %arg0, %c0_i32 : i32, i32
  }
  func.func @transform_1(%arg0: i32) -> (i32, i32) {
    %c0_i32 = arith.constant 0 : i32
    %c0_i32_0 = arith.constant 0 : i32
    %c0_i32_1 = arith.constant 0 : i32
    return %c0_i32, %c0_i32_0 : i32, i32
  }
  func.func @transform_2(%arg0: i32) -> (i32, i32) {
    %c0_i32 = arith.constant 0 : i32
    %c0_i32_0 = arith.constant 0 : i32
    %c0_i32_1 = arith.constant 0 : i32
    return %c0_i32, %c0_i32_0 : i32, i32
  }
  func.func @transform_3(%arg0: i32) -> (i32, i32) {
    %c0_i32 = arith.constant 0 : i32
    %c0_i32_0 = arith.constant 0 : i32
    return %arg0, %c0_i32 : i32, i32
  }
}

</mosaic_0001>

<llo_original>
// kernel: multi_encoder_decoder_forward.1
$region0: #{multi_encoder_decoder_forward.1}
  #allocation0 [shape = 'u32[]', space=smem, size = 0x4, offset = 0x4, fixed_abs, tag = 'smem constant byte address 0x4 - core index']
  #allocation1 [shape = 'u32[144,128]{1,0:T(1,128)}', space=vmem, size = 0x12000, scoped, tag = 'internal scratch']
  %s0 = inlined_call_operand.vmem [shape: bf16[16,48], index: 0, kind: input, shape index: {}]
  %s1 = inlined_call_operand.vmem [shape: bf16[148,32], index: 1, kind: input, shape index: {}]
  %s2 = inlined_call_operand.vmem [shape: bf16[99,128], index: 2, kind: input, shape index: {}]
  %s3 = inlined_call_operand.vmem [shape: f32[16,128], index: 3, kind: output, shape index: {}]
  %s4 = sld [smem:[#allocation0]]
  $region22: #{multi_encoder_decoder_forward.1} parent=0
    _
  %s6 = ssub.s32 1, %s4
  %s7 = scalar_select 0, %s6, %s4
  // Predicated region
  $region2: #{multi_encoder_decoder_forward.1} parent=0 // pred_check
    _
  $region3: #{multi_encoder_decoder_forward.1} parent=0 // pred_check_branch
    %9 = sbr.rel (0) target = $region5
  $region4: #{multi_encoder_decoder_forward.1} parent=0 // pred_region
    _
  $region5: #{multi_encoder_decoder_forward.1} parent=0 // pred_fallthru
    _
  // Predicated region
  $region6: #{multi_encoder_decoder_forward.1} parent=0 // pred_check
    _
  $region7: #{multi_encoder_decoder_forward.1} parent=0 // pred_check_branch
    %11 = sbr.rel (0) target = $region9
  $region8: #{multi_encoder_decoder_forward.1} parent=0 // pred_region
    _
  $region9: #{multi_encoder_decoder_forward.1} parent=0 // pred_fallthru
    _
  // Predicated region
  $region10: #{multi_encoder_decoder_forward.1} parent=0 // pred_check
    _
  $region11: #{multi_encoder_decoder_forward.1} parent=0 // pred_check_branch
    %13 = sbr.rel (0) target = $region13
  $region12: #{multi_encoder_decoder_forward.1} parent=0 // pred_region
    _
  $region13: #{multi_encoder_decoder_forward.1} parent=0 // pred_fallthru
    _
  %v15 = vld [vmem:[%s1 + $0x48] sm:$0x3]
  %v16 = vunpack.c.l.bf16 %v15
  %v17 = vld [vmem:[%s2 + $0x30] sm:$0x3]
  %v18 = vunpack.c.l.bf16 %v17
  %v19 = vld [vmem:[%s0] sm:$0xf]
  %v20 = vld [vmem:[%s0 + $0x4] sm:$0xf]
  %v21 = vld [vmem:[%s1] sm:$0xf]
  %v22 = vld [vmem:[%s1 + $0x4] sm:$0xf]
  %v23 = vld [vmem:[%s1 + $0x8] sm:$0xf]
  %v24 = vld [vmem:[%s1 + $0xc] sm:$0xf]
  %v25 = vld [vmem:[%s1 + $0x10] sm:$0xf]
  %v26 = vld [vmem:[%s1 + $0x14] sm:$0xf]
  %v27 = vlaneseq
  %v28 = vshrl.u32 %v27, 7
  %v29 = vsub.s32 0, %v28
  %v30 = vrot.slane %v16, %v29
  %v33 = vunpack.c.l.b16 %v19
  %v34 = vunpack.c.l.b16 %v20
  %v35 = vpack.c.b16 %v34, %v33
  %v42 = vunpack.c.l.b16 %v21
  %v43 = vunpack.c.l.b16 %v22
  %v44 = vunpack.c.l.b16 %v23
  %v45 = vunpack.c.l.b16 %v24
  %v46 = vunpack.c.l.b16 %v25
  %v47 = vunpack.c.l.b16 %v26
  %v48 = vpack.c.b16 %v43, %v42
  %v49 = vpack.c.b16 %v45, %v44
  %v50 = vpack.c.b16 %v47, %v46
  %vm54 = vcmask 392192
  %v56 = vsel %vm54, %v35, 0
  %58 = vmatprep.subr.bf16.mxu0 0
  %59 = vmatpush1.bf16.msra.mxu0 %v48
  %60 = vmatprep.subr.bf16.mxu0 0
  %61 = vmatpush1.bf16.msra.mxu0 %v49
  %62 = vmatprep.subr.bf16.mxu0 0
  %63 = vmatpush1.bf16.msra.mxu0 %v50
  %64 = vmatprep.subr.bf16.mxu0 0
  %65 = vmatpush1.bf16.msra.mxu0 0
  %66 = vmatprep.subr.bf16.mxu0 0
  %67 = vmatpush1.bf16.msra.mxu0 0
  %68 = vmatprep.subr.bf16.mxu0 0
  %69 = vmatpush1.bf16.msra.mxu0 0
  %70 = vmatprep.subr.bf16.mxu0 0
  %71 = vmatpush1.bf16.msra.mxu0 0
  %72 = vmatprep.subr.bf16.mxu0 0
  %73 = vmatpush1.bf16.msra.mxu0 0
  %74 = vmatprep.subr.bf16.mxu0 0
  %75 = vmatpush1.bf16.msra.mxu0 0
  %76 = vmatprep.subr.bf16.mxu0 0
  %77 = vmatpush1.bf16.msra.mxu0 0
  %78 = vmatprep.subr.bf16.mxu0 0
  %79 = vmatpush1.bf16.msra.mxu0 0
  %80 = vmatprep.subr.bf16.mxu0 0
  %81 = vmatpush1.bf16.msra.mxu0 0
  %82 = vmatprep.subr.bf16.mxu0 0
  %83 = vmatpush1.bf16.msra.mxu0 0
  %84 = vmatprep.subr.bf16.mxu0 0
  %85 = vmatpush1.bf16.msra.mxu0 0
  %86 = vmatprep.subr.bf16.mxu0 0
  %87 = vmatpush1.bf16.msra.mxu0 0
  %88 = vmatprep.subr.bf16.mxu0 0
  %89 = vmatpush1.bf16.msra.mxu0 0
  %90 = vmatprep.mubr.bf16.mxu0 0
  %91 = vmatmul.mubr.bf16.gmra.mrb[0].mxu0 %v56
  %v92 = vpop.f32.mrb[0].mxu0
  %v93 = vadd.f32 %v30, %v92
  %v94 = vpop.f32.mrb[0].mxu0
  %v95 = vpop.f32.mrb[0].mxu0
  %v96 = vadd.f32 %v30, %v95
  %v97 = vpop.f32.mrb[0].mxu0
  %98 = vdwg.mxu0
  %v99 = vpack.c.bf16 %v96, %v93
  %v100 = vld [vmem:[%s1 + $0x18] sm:$0xf]
  %v101 = vld [vmem:[%s1 + $0x1c] sm:$0xf]
  %v102 = vld [vmem:[%s1 + $0x20] sm:$0xf]
  %v103 = vld [vmem:[%s1 + $0x24] sm:$0xf]
  %v104 = vlaneseq
  %v105 = vshrl.u32 %v104, 7
  %v106 = vsub.s32 1, %v105
  %v107 = vrot.slane %v16, %v106
  %v112 = vunpack.c.l.b16 %v100
  %v113 = vunpack.c.l.b16 %v101
  %v114 = vunpack.c.l.b16 %v102
  %v115 = vunpack.c.l.b16 %v103
  %v116 = vpack.c.b16 %v113, %v112
  %v117 = vpack.c.b16 %v115, %v114
  %vm120 = vcmask 261120
  %v122 = vsel %vm120, %v99, 0
  %124 = vmatprep.subr.bf16.mxu0 0
  %125 = vmatpush1.bf16.msra.mxu0 %v116
  %126 = vmatprep.subr.bf16.mxu0 0
  %127 = vmatpush1.bf16.msra.mxu0 %v117
  %128 = vmatprep.subr.bf16.mxu0 0
  %129 = vmatpush1.bf16.msra.mxu0 0
  %130 = vmatprep.subr.bf16.mxu0 0
  %131 = vmatpush1.bf16.msra.mxu0 0
  %132 = vmatprep.subr.bf16.mxu0 0
  %133 = vmatpush1.bf16.msra.mxu0 0
  %134 = vmatprep.subr.bf16.mxu0 0
  %135 = vmatpush1.bf16.msra.mxu0 0
  %136 = vmatprep.subr.bf16.mxu0 0
  %137 = vmatpush1.bf16.msra.mxu0 0
  %138 = vmatprep.subr.bf16.mxu0 0
  %139 = vmatpush1.bf16.msra.mxu0 0
  %140 = vmatprep.subr.bf16.mxu0 0
  %141 = vmatpush1.bf16.msra.mxu0 0
  %142 = vmatprep.subr.bf16.mxu0 0
  %143 = vmatpush1.bf16.msra.mxu0 0
  %144 = vmatprep.subr.bf16.mxu0 0
  %145 = vmatpush1.bf16.msra.mxu0 0
  %146 = vmatprep.subr.bf16.mxu0 0
  %147 = vmatpush1.bf16.msra.mxu0 0
  %148 = vmatprep.subr.bf16.mxu0 0
  %149 = vmatpush1.bf16.msra.mxu0 0
  %150 = vmatprep.subr.bf16.mxu0 0
  %151 = vmatpush1.bf16.msra.mxu0 0
  %152 = vmatprep.subr.bf16.mxu0 0
  %153 = vmatpush1.bf16.msra.mxu0 0
  %154 = vmatprep.subr.bf16.mxu0 0
  %155 = vmatpush1.bf16.msra.mxu0 0
  %156 = vmatprep.mubr.bf16.mxu0 0
  %157 = vmatmul.mubr.bf16.gmra.mrb[0].mxu0 %v122
  %v158 = vpop.f32.mrb[0].mxu0
  %v159 = vadd.f32 %v107, %v158
  %v160 = vpop.f32.mrb[0].mxu0
  %v161 = vpop.f32.mrb[0].mxu0
  %v162 = vadd.f32 %v107, %v161
  %v163 = vpop.f32.mrb[0].mxu0
  %164 = vdwg.mxu0
  %v165 = vmax.f32 %v159, 0.0
  %v166 = vmax.f32 %v162, 0.0
  %v167 = vpack.c.bf16 %v166, %v165
  %v168 = vld [vmem:[%s1 + $0x28] sm:$0xf]
  %v169 = vld [vmem:[%s1 + $0x2c] sm:$0xf]
  %v170 = vld [vmem:[%s1 + $0x30] sm:$0xf]
  %v171 = vld [vmem:[%s1 + $0x34] sm:$0xf]
  %v172 = vlaneseq
  %v173 = vshrl.u32 %v172, 7
  %v174 = vsub.s32 2, %v173
  %v175 = vrot.slane %v16, %v174
  %v180 = vunpack.c.l.b16 %v168
  %v181 = vunpack.c.l.b16 %v169
  %v182 = vunpack.c.l.b16 %v170
  %v183 = vunpack.c.l.b16 %v171
  %v184 = vpack.c.b16 %v181, %v180
  %v185 = vpack.c.b16 %v183, %v182
  %v189 = vsel %vm120, %v167, 0
  %191 = vmatprep.subr.bf16.mxu0 0
  %192 = vmatpush1.bf16.msra.mxu0 %v184
  %193 = vmatprep.subr.bf16.mxu0 0
  %194 = vmatpush1.bf16.msra.mxu0 %v185
  %195 = vmatprep.subr.bf16.mxu0 0
  %196 = vmatpush1.bf16.msra.mxu0 0
  %197 = vmatprep.subr.bf16.mxu0 0
  %198 = vmatpush1.bf16.msra.mxu0 0
  %199 = vmatprep.subr.bf16.mxu0 0
  %200 = vmatpush1.bf16.msra.mxu0 0
  %201 = vmatprep.subr.bf16.mxu0 0
  %202 = vmatpush1.bf16.msra.mxu0 0
  %203 = vmatprep.subr.bf16.mxu0 0
  %204 = vmatpush1.bf16.msra.mxu0 0
  %205 = vmatprep.subr.bf16.mxu0 0
  %206 = vmatpush1.bf16.msra.mxu0 0
  %207 = vmatprep.subr.bf16.mxu0 0
  %208 = vmatpush1.bf16.msra.mxu0 0
  %209 = vmatprep.subr.bf16.mxu0 0
  %210 = vmatpush1.bf16.msra.mxu0 0
  %211 = vmatprep.subr.bf16.mxu0 0
  %212 = vmatpush1.bf16.msra.mxu0 0
  %213 = vmatprep.subr.bf16.mxu0 0
  %214 = vmatpush1.bf16.msra.mxu0 0
  %215 = vmatprep.subr.bf16.mxu0 0
  %216 = vmatpush1.bf16.msra.mxu0 0
  %217 = vmatprep.subr.bf16.mxu0 0
  %218 = vmatpush1.bf16.msra.mxu0 0
  %219 = vmatprep.subr.bf16.mxu0 0
  %220 = vmatpush1.bf16.msra.mxu0 0
  %221 = vmatprep.subr.bf16.mxu0 0
  %222 = vmatpush1.bf16.msra.mxu0 0
  %223 = vmatprep.mubr.bf16.mxu0 0
  %224 = vmatmul.mubr.bf16.gmra.mrb[0].mxu0 %v189
  %v225 = vpop.f32.mrb[0].mxu0
  %v226 = vadd.f32 %v175, %v225
  %v227 = vpop.f32.mrb[0].mxu0
  %v228 = vpop.f32.mrb[0].mxu0
  %v229 = vadd.f32 %v175, %v228
  %v230 = vpop.f32.mrb[0].mxu0
  %231 = vdwg.mxu0
  %v232 = vmax.f32 %v226, 0.0
  %v233 = vmax.f32 %v229, 0.0
  %v234 = vadd.f32 %v232, %v165
  %v235 = vadd.f32 %v233, %v166
  %v236 = vpack.c.bf16 %v235, %v234
  %v237 = vld [vmem:[%s1 + $0x38] sm:$0xf]
  %v238 = vld [vmem:[%s1 + $0x3c] sm:$0xf]
  %v239 = vld [vmem:[%s1 + $0x40] sm:$0xf]
  %v240 = vld [vmem:[%s1 + $0x44] sm:$0xf]
  %v241 = vlaneseq
  %v242 = vshrl.u32 %v241, 7
  %v243 = vsub.s32 3, %v242
  %v244 = vrot.slane %v16, %v243
  %v249 = vunpack.c.l.b16 %v237
  %v250 = vunpack.c.l.b16 %v238
  %v251 = vunpack.c.l.b16 %v239
  %v252 = vunpack.c.l.b16 %v240
  %v253 = vpack.c.b16 %v250, %v249
  %v254 = vpack.c.b16 %v252, %v251
  %v258 = vsel %vm120, %v236, 0
  %260 = vmatprep.subr.bf16.mxu0 0
  %261 = vmatpush1.bf16.msra.mxu0 %v253
  %262 = vmatprep.subr.bf16.mxu0 0
  %263 = vmatpush1.bf16.msra.mxu0 %v254
  %264 = vmatprep.subr.bf16.mxu0 0
  %265 = vmatpush1.bf16.msra.mxu0 0
  %266 = vmatprep.subr.bf16.mxu0 0
  %267 = vmatpush1.bf16.msra.mxu0 0
  %268 = vmatprep.subr.bf16.mxu0 0
  %269 = vmatpush1.bf16.msra.mxu0 0
  %270 = vmatprep.subr.bf16.mxu0 0
  %271 = vmatpush1.bf16.msra.mxu0 0
  %272 = vmatprep.subr.bf16.mxu0 0
  %273 = vmatpush1.bf16.msra.mxu0 0
  %274 = vmatprep.subr.bf16.mxu0 0
  %275 = vmatpush1.bf16.msra.mxu0 0
  %276 = vmatprep.subr.bf16.mxu0 0
  %277 = vmatpush1.bf16.msra.mxu0 0
  %278 = vmatprep.subr.bf16.mxu0 0
  %279 = vmatpush1.bf16.msra.mxu0 0
  %280 = vmatprep.subr.bf16.mxu0 0
  %281 = vmatpush1.bf16.msra.mxu0 0
  %282 = vmatprep.subr.bf16.mxu0 0
  %283 = vmatpush1.bf16.msra.mxu0 0
  %284 = vmatprep.subr.bf16.mxu0 0
  %285 = vmatpush1.bf16.msra.mxu0 0
  %286 = vmatprep.subr.bf16.mxu0 0
  %287 = vmatpush1.bf16.msra.mxu0 0
  %288 = vmatprep.subr.bf16.mxu0 0
  %289 = vmatpush1.bf16.msra.mxu0 0
  %290 = vmatprep.subr.bf16.mxu0 0
  %291 = vmatpush1.bf16.msra.mxu0 0
  %292 = vmatprep.mubr.bf16.mxu0 0
  %293 = vmatmul.mubr.bf16.gmra.mrb[0].mxu0 %v258
  %v294 = vpop.f32.mrb[0].mxu0
  %v295 = vadd.f32 %v244, %v294
  %v296 = vpop.f32.mrb[0].mxu0
  %v297 = vpop.f32.mrb[0].mxu0
  %v298 = vadd.f32 %v244, %v297
  %v299 = vpop.f32.mrb[0].mxu0
  %300 = vdwg.mxu0
  %v301 = vmax.f32 %v295, 0.0
  %v302 = vmax.f32 %v298, 0.0
  %v303 = vadd.f32 %v301, %v234
  %v304 = vadd.f32 %v302, %v235
  %307 = vrot.lane.b32.xlu0 %v234, 32
  %v308 = vpop.permute.xlu0 %307
  %309 = vrot.lane.b32.xlu0 %v235, 32
  %v310 = vpop.permute.xlu0 %309
  %315 = vrot.lane.b32.xlu0 %v303, 64
  %v316 = vpop.permute.xlu0 %315
  %317 = vrot.lane.b32.xlu0 %v304, 64
  %v318 = vpop.permute.xlu0 %317
  %v321 = vsel %vm120, %v165, %v308
  %v322 = vsel %vm120, %v166, %v310
  %vm323 = vcmask 523264
  %v324 = vsel %vm323, %v321, %v316
  %v325 = vsel %vm323, %v322, %v318
  %v326 = vpack.c.bf16 %v325, %v324
  %v327 = vld [vmem:[%s2] sm:$0xf]
  %v328 = vld [vmem:[%s2 + $0x4] sm:$0xf]
  %v329 = vld [vmem:[%s2 + $0x8] sm:$0xf]
  %v330 = vld [vmem:[%s2 + $0xc] sm:$0xf]
  %v331 = vld [vmem:[%s2 + $0x10] sm:$0xf]
  %v332 = vld [vmem:[%s2 + $0x14] sm:$0xf]
  %v333 = vld [vmem:[%s2 + $0x18] sm:$0xf]
  %v334 = vld [vmem:[%s2 + $0x1c] sm:$0xf]
  %v335 = vld [vmem:[%s2 + $0x20] sm:$0xf]
  %v336 = vld [vmem:[%s2 + $0x24] sm:$0xf]
  %v337 = vld [vmem:[%s2 + $0x28] sm:$0xf]
  %v338 = vld [vmem:[%s2 + $0x2c] sm:$0xf]
  %v339 = vlaneseq
  %v340 = vshrl.u32 %v339, 7
  %v341 = vsub.s32 0, %v340
  %v342 = vrot.slane %v18, %v341
  %v355 = vunpack.c.l.b16 %v327
  %v356 = vunpack.c.l.b16 %v328
  %v357 = vunpack.c.l.b16 %v329
  %v358 = vunpack.c.l.b16 %v330
  %v359 = vunpack.c.l.b16 %v331
  %v360 = vunpack.c.l.b16 %v332
  %v361 = vunpack.c.l.b16 %v333
  %v362 = vunpack.c.l.b16 %v334
  %v363 = vunpack.c.l.b16 %v335
  %v364 = vunpack.c.l.b16 %v336
  %v365 = vunpack.c.l.b16 %v337
  %v366 = vunpack.c.l.b16 %v338
  %v367 = vpack.c.b16 %v356, %v355
  %v368 = vpack.c.b16 %v358, %v357
  %v369 = vpack.c.b16 %v360, %v359
  %v370 = vpack.c.b16 %v362, %v361
  %v371 = vpack.c.b16 %v364, %v363
  %v372 = vpack.c.b16 %v366, %v365
  %vm379 = vcmask 785408
  %v381 = vsel %vm379, %v326, 0
  %383 = vmatprep.subr.bf16.mxu0 0
  %384 = vmatpush1.bf16.msra.mxu0 %v367
  %385 = vmatprep.subr.bf16.mxu0 0
  %386 = vmatpush1.bf16.msra.mxu0 %v368
  %387 = vmatprep.subr.bf16.mxu0 0
  %388 = vmatpush1.bf16.msra.mxu0 %v369
  %389 = vmatprep.subr.bf16.mxu0 0
  %390 = vmatpush1.bf16.msra.mxu0 %v370
  %391 = vmatprep.subr.bf16.mxu0 0
  %392 = vmatpush1.bf16.msra.mxu0 %v371
  %393 = vmatprep.subr.bf16.mxu0 0
  %394 = vmatpush1.bf16.msra.mxu0 %v372
  %395 = vmatprep.subr.bf16.mxu0 0
  %396 = vmatpush1.bf16.msra.mxu0 0
  %397 = vmatprep.subr.bf16.mxu0 0
  %398 = vmatpush1.bf16.msra.mxu0 0
  %399 = vmatprep.subr.bf16.mxu0 0
  %400 = vmatpush1.bf16.msra.mxu0 0
  %401 = vmatprep.subr.bf16.mxu0 0
  %402 = vmatpush1.bf16.msra.mxu0 0
  %403 = vmatprep.subr.bf16.mxu0 0
  %404 = vmatpush1.bf16.msra.mxu0 0
  %405 = vmatprep.subr.bf16.mxu0 0
  %406 = vmatpush1.bf16.msra.mxu0 0
  %407 = vmatprep.subr.bf16.mxu0 0
  %408 = vmatpush1.bf16.msra.mxu0 0
  %409 = vmatprep.subr.bf16.mxu0 0
  %410 = vmatpush1.bf16.msra.mxu0 0
  %411 = vmatprep.subr.bf16.mxu0 0
  %412 = vmatpush1.bf16.msra.mxu0 0
  %413 = vmatprep.subr.bf16.mxu0 0
  %414 = vmatpush1.bf16.msra.mxu0 0
  %415 = vmatprep.mubr.bf16.mxu0 0
  %416 = vmatmul.mubr.bf16.gmra.mrb[0].mxu0 %v381
  %v417 = vpop.f32.mrb[0].mxu0
  %v418 = vadd.f32 %v342, %v417
  %v419 = vpop.f32.mrb[0].mxu0
  %v420 = vpop.f32.mrb[0].mxu0
  %v421 = vadd.f32 %v342, %v420
  %v422 = vpop.f32.mrb[0].mxu0
  %423 = vdwg.mxu0
  %v424 = vlaneseq
  %v425 = vshrl.u32 %v424, 7
  %v426 = vsub.s32 1, %v425
  %v427 = vrot.slane %v18, %v426
  %v428 = vmul.f32 %v418, %v427
  %v429 = vmul.f32 %v421, %v427
  %v430 = vlaneseq
  %v431 = vshrl.u32 %v430, 7
  %v432 = vsub.s32 2, %v431
  %v433 = vrot.slane %v18, %v432
  %v434 = vadd.f32 %v428, %v433
  %v435 = vadd.f32 %v429, %v433
  %436 = vst [vmem:[%s3] sm:$0xff] %v434
  %437 = vst [vmem:[%s3 + $0x8] sm:$0xff] %v435
  // Predicated region
  $region14: #{multi_encoder_decoder_forward.1} parent=0 // pred_check
    _
  $region15: #{multi_encoder_decoder_forward.1} parent=0 // pred_check_branch
    %439 = sbr.rel (0) target = $region17
  $region16: #{multi_encoder_decoder_forward.1} parent=0 // pred_region
    _
  $region17: #{multi_encoder_decoder_forward.1} parent=0 // pred_fallthru
    _
  // Predicated region
  $region18: #{multi_encoder_decoder_forward.1} parent=0 // pred_check
    _
  $region19: #{multi_encoder_decoder_forward.1} parent=0 // pred_check_branch
    %441 = sbr.rel (0) target = $region21
  $region20: #{multi_encoder_decoder_forward.1} parent=0 // pred_region
    _
  $region21: #{multi_encoder_decoder_forward.1} parent=0 // pred_fallthru
    _

</llo_original>
